<compile_context>
chip_gen: v7x
topology: tpu7x:2x2x1
jax: 0.10.0
libtpu: 0.0.40
codegen_flags: <defaults>
</compile_context>

<pallas_src>
import jax
import jax.numpy as jnp
from jax import lax
from jax.experimental import pallas as pl
from jax.experimental.pallas import tpu as pltpu

LOSS_WEIGHTS = dict(
    lambda_hole=6.0,
    lambda_valid=1.0,
    lambda_adv=0.1,
    lambda_mutal_info=0.01,
    lambda_style=0.0,
    lambda_percep=0.0,
    lambda_tv=0.0,
)
LAMBDA_UNCERTAINTY = 0.1

LANES = 128
_MIB = 1 << 20


def _cdiv(a, b):
    return -(-a // b)


def _round_up(x, m):
    return _cdiv(x, m) * m


def _vmem_capacity_bytes():
    try:
        return int(pltpu.get_tpu_info().vmem_capacity_bytes)
    except Exception:  # be conservative (v7x has the smallest VMEM: 64 MiB)
        return 64 * _MIB


def _choose_tiling(n_rows, per_row_footprint, align, budget_bytes):
    """Pick (s_tile, n_tiles): s_tile aligned (or full extent), per-step
    footprint <= budget, and >=2 (preferably even) tiles so a 2-TC chip (v7x)
    can shard the 1-D grid."""
    if n_rows <= align:
        return n_rows, 1  # single full-extent tile (always a legal block shape)
    s_max = max(align, (budget_bytes // max(per_row_footprint, 1)) // align * align)
    if n_rows <= s_max:
        # Whole problem fits one step: still split in two aligned tiles so both
        # TensorCores get work on v7x; the remainder is masked in-kernel.
        s_tile = max(align, _round_up(_cdiv(n_rows, 2), align))
    else:
        s_tile = s_max
    n_tiles = _cdiv(n_rows, s_tile)
    if n_tiles > 1 and n_tiles % 2 == 1:  # prefer an even count for 2-TC balance
        cand = max(align, _round_up(_cdiv(n_rows, n_tiles + 1), align))
        if cand <= s_max and _cdiv(n_rows, cand) % 2 == 0:
            s_tile, n_tiles = cand, _cdiv(n_rows, cand)
    return s_tile, n_tiles


def _make_kernel(num_channels, n_rows, s_tile):
    needs_row_mask = (n_rows % s_tile) != 0

    def kernel(pred_ref, gt_ref, mask_ref, unc_ref, mi_ref, out_ref):
        b, _, s, l = mask_ref.shape
        # Fold channels one at a time: never materialize the full (B,C,S,128)
        # |diff| tensor — only a (B,S,128) f32 accumulator is live.
        adiff = jnp.zeros((b, s, l), jnp.float32)
        for c in range(num_channels):  # C is tiny (3): unrolled
            p = pred_ref[:, c, :, :].astype(jnp.float32)
            g = gt_ref[:, c, :, :].astype(jnp.float32)
            adiff = adiff + jnp.abs(p - g)
        mask = mask_ref[:, 0, :, :].astype(jnp.float32)
        unc = unc_ref[:, 0, :, :].astype(jnp.float32)
        mi = mi_ref[:, 0, :, :].astype(jnp.float32)

        if needs_row_mask:
            # Last grid step reads past n_rows (garbage rows): zero them out
            # before the reductions.  where() selects, so NaN/Inf garbage is safe.
            rows_left = n_rows - pl.program_id(0) * s_tile
            row_ids = lax.broadcasted_iota(jnp.int32, (b, s, l), 1)
            valid = row_ids < rows_left
            zero = jnp.zeros_like(adiff)
            adiff = jnp.where(valid, adiff, zero)
            mask = jnp.where(valid, mask, zero)
            unc = jnp.where(valid, unc, zero)
            mi = jnp.where(valid, mi, zero)

        out_ref[0, 0] = jnp.sum(adiff * mask)  # hole numerator: sum |d| * m
        out_ref[0, 1] = jnp.sum(adiff)         # sum |d|  (valid num = total - hole)
        out_ref[0, 2] = jnp.sum(mask)          # sum m
        out_ref[0, 3] = jnp.sum(unc)           # sum log(exp(u)) == sum u
        out_ref[0, 4] = jnp.sum(mi)            # sum mutual_info

    return kernel


@jax.jit
def inpaint_loss(pred_imgs, gt_imgs, masks, uncertainty, mutual_info,
                 lambda_uncertainty=LAMBDA_UNCERTAINTY):
    """pred_imgs/gt_imgs: [B,C,H,W]; masks/uncertainty/mutual_info: [B,1,H,W].
    Masks must lie in [0,1] (the |d*(1-m)| = |d| - |d|*m identity relies on it)."""
    B, C, H, W = pred_imgs.shape
    HW = H * W

    # ---- lane-dense layout: spatial -> (rows, 128); pad only if HW % 128 != 0.
    pad = (-HW) % LANES
    n_rows = (HW + pad) // LANES

    def to_rows(x, ch):
        x = x.reshape(B, ch, HW)
        if pad:
            x = jnp.pad(x, ((0, 0), (0, 0), (0, pad)))  # zeros add nothing to sums
        return x.reshape(B, ch, n_rows, LANES)

    pred4 = to_rows(pred_imgs, C)
    gt4 = to_rows(gt_imgs, C)
    mask4 = to_rows(masks, 1)
    unc4 = to_rows(uncertainty, 1)
    mi4 = to_rows(mutual_info, 1)

    # ---- tile selection: footprint-aware, generation-aware budget.
    itemsizes = [pred_imgs.dtype.itemsize, gt_imgs.dtype.itemsize,
                 masks.dtype.itemsize, uncertainty.dtype.itemsize,
                 mutual_info.dtype.itemsize]
    align = {4: 8, 2: 16, 1: 32}.get(min(itemsizes), 8)  # sublane align per packed dtype
    block_bytes_per_row = B * LANES * (
        pred_imgs.dtype.itemsize * C + gt_imgs.dtype.itemsize * C
        + masks.dtype.itemsize + uncertainty.dtype.itemsize
        + mutual_info.dtype.itemsize)
    # 2x double-buffered input blocks + ~8 live f32 per-pixel intermediates
    # (accumulator, per-channel casts, mask/unc/mi f32, masked product).
    per_row_footprint = 2 * block_bytes_per_row + 8 * B * LANES * 4

    vmem_cap = _vmem_capacity_bytes()
    budget = min(40 * _MIB, (vmem_cap * 5) // 8)  # <= 40 MiB even on v7x (64 MiB VMEM)
    s_tile, n_tiles = _choose_tiling(n_rows, per_row_footprint, align, budget)

    footprint = s_tile * per_row_footprint + _MIB
    vmem_limit = int(min(max(footprint + 8 * _MIB, 16 * _MIB),
                         min(48 * _MIB, (vmem_cap * 3) // 4)))

    img_spec = pl.BlockSpec((B, C, s_tile, LANES), lambda i: (0, 0, i, 0))
    map_spec = pl.BlockSpec((B, 1, s_tile, LANES), lambda i: (0, 0, i, 0))
    out_spec = pl.BlockSpec((1, 5), lambda i: (i, 0),
                            memory_space=pltpu.MemorySpace.SMEM)

    bytes_accessed = int(pred4.size * pred4.dtype.itemsize
                         + gt4.size * gt4.dtype.itemsize
                         + mask4.size * mask4.dtype.itemsize
                         + unc4.size * unc4.dtype.itemsize
                         + mi4.size * mi4.dtype.itemsize
                         + n_tiles * 5 * 4)
    cost = pl.CostEstimate(flops=int(B * n_rows * LANES * (3 * C + 6)),
                           transcendentals=0, bytes_accessed=bytes_accessed)

    partials = pl.pallas_call(
        _make_kernel(C, n_rows, s_tile),
        out_shape=jax.ShapeDtypeStruct((n_tiles, 5), jnp.float32),
        grid_spec=pltpu.PrefetchScalarGridSpec(
            num_scalar_prefetch=0,
            grid=(n_tiles,),
            in_specs=[img_spec, img_spec, map_spec, map_spec, map_spec],
            out_specs=out_spec,
        ),
        compiler_params=pltpu.CompilerParams(
            # TODO(synk): verify with xprof that "parallel" shards this 1-D grid
            # across both TensorCores on v7x; switch to pltpu.CORE_PARALLEL if not.
            dimension_semantics=("parallel",),
            vmem_limit_bytes=vmem_limit,
        ),
        cost_estimate=cost,
    )(pred4, gt4, mask4, unc4, mi4)

    # Tiny scalar epilogue (n_tiles x 5 floats) in plain jnp.
    sums = jnp.sum(partials, axis=0)
    hole_num, total_abs, mask_sum, unc_sum, mi_sum = (sums[k] for k in range(5))

    n_img = float(B * C * HW)  # broadcasted pred*mask has B*C*H*W elements
    n_map = float(B * HW)      # masks / uncertainty / mutual_info element count

    mean_mask = mask_sum / n_map
    hole_loss = (hole_num / n_img) / mean_mask
    # |d*(1-m)| == |d| - |d|*m because masks are in [0, 1].
    valid_loss = ((total_abs - hole_num) / n_img) / (1.0 - mean_mask)
    loss_rec = (hole_loss * LOSS_WEIGHTS["lambda_hole"]
                + valid_loss * LOSS_WEIGHTS["lambda_valid"])
    unc_reg = (unc_sum / n_map) * lambda_uncertainty  # mean(log(exp(u))) == mean(u)
    l1_dist = total_abs / n_img
    loss_mutual_info = (mi_sum / n_map) * LOSS_WEIGHTS["lambda_mutal_info"]

    gen_adv_loss = jnp.float32(0.0)  # TODO(synk): needs undefined Discriminator/AdversarialLoss
    dis_loss = jnp.float32(0.0)      # TODO(synk): needs undefined Discriminator/AdversarialLoss
    # loss_style = loss_percep = loss_tv = 0 (their lambdas are 0)
    gen_loss = loss_rec + gen_adv_loss + unc_reg

    aux = {
        "loss_rec": loss_rec,
        "uncertainty_reg": unc_reg,
        "l1_dist": l1_dist,
        "loss_mutual_info": loss_mutual_info,
        "gen_adv_loss": gen_adv_loss,
        "mean_mask": mean_mask,
    }
    return gen_loss, dis_loss, aux


def _reference(pred, gt, masks, uncertainty, mutual_info):
    # Pure-JAX reference mirroring the torch forward (same code path).
    u = jnp.exp(uncertainty)
    diff = pred - gt
    mean_mask = jnp.mean(masks)
    hole = jnp.mean(jnp.abs(diff * masks)) / mean_mask
    valid = jnp.mean(jnp.abs(diff * (1.0 - masks))) / jnp.mean(1.0 - masks)
    loss_rec = hole * LOSS_WEIGHTS["lambda_hole"] + valid * LOSS_WEIGHTS["lambda_valid"]
    unc_reg = jnp.mean(jnp.log(u)) * LAMBDA_UNCERTAINTY
    l1_dist = jnp.mean(jnp.abs(diff))
    mi_loss = jnp.mean(mutual_info) * LOSS_WEIGHTS["lambda_mutal_info"]
    gen_loss = loss_rec + 0.0 + unc_reg
    return gen_loss, 0.0, loss_rec, unc_reg, l1_dist, mi_loss


if __name__ == "__main__":
    def run_case(B, C, H, W, dtype):
        key = jax.random.PRNGKey(0)
        k1, k2, k3, k4, k5 = jax.random.split(key, 5)
        pred = jax.random.uniform(k1, (B, C, H, W), jnp.float32).astype(dtype)
        gt = jax.random.uniform(k2, (B, C, H, W), jnp.float32).astype(dtype)
        msk = (jax.random.uniform(k3, (B, 1, H, W)) > 0.5).astype(dtype)
        unc = (jax.random.normal(k4, (B, 1, H, W), jnp.float32) * 0.1).astype(dtype)
        mi = jax.random.uniform(k5, (B, 1, H, W), jnp.float32).astype(dtype)

        gen_loss, dis_loss, aux = inpaint_loss(pred, gt, msk, unc, mi)
        jax.block_until_ready((gen_loss, dis_loss))

        ref = _reference(pred.astype(jnp.float32), gt.astype(jnp.float32),
                         msk.astype(jnp.float32), unc.astype(jnp.float32),
                         mi.astype(jnp.float32))
        got = (gen_loss, dis_loss, aux["loss_rec"], aux["uncertainty_reg"],
               aux["l1_dist"], aux["loss_mutual_info"])
        for g, r in zip(got, ref):
            g, r = float(g), float(r)
            assert abs(g - r) <= 1e-4 + 2e-4 * abs(r), (dtype, g, r)

    # c_img=3 as in InpaintLoss.__init__
    run_case(2, 3, 16, 16, jnp.float32)   # HW=256 -> 2 rows, single full-extent tile
    run_case(2, 3, 40, 48, jnp.float32)   # HW=1920 -> 15 rows, 2 tiles + remainder mask
    run_case(2, 3, 16, 16, jnp.bfloat16)  # native bf16 streaming, in-kernel f32 cast
    print("KERNEL_OK")
</pallas_src>

<mosaic_0001>
module attributes {stable_mosaic.version = 11 : i64} {
  func.func @kernel(%arg0: i32, %arg1: memref<2x3x2x128xf32, #tpu.memory_space<vmem>>, %arg2: memref<2x3x2x128xf32, #tpu.memory_space<vmem>>, %arg3: memref<2x1x2x128xf32, #tpu.memory_space<vmem>>, %arg4: memref<2x1x2x128xf32, #tpu.memory_space<vmem>>, %arg5: memref<2x1x2x128xf32, #tpu.memory_space<vmem>>, %arg6: memref<1x5xf32, #tpu.memory_space<smem>>) attributes {dimension_semantics = [#tpu.dimension_semantics<parallel>], iteration_bounds = array<i64: 1>, scalar_prefetch = 0 : i64, scratch_operands = 0 : i64, tpu.core_type = #tpu.core_type<tc>, window_params = [{transform_indices = @transform_0, window_bounds = array<i64: 2, 3, 2, 128>}, {transform_indices = @transform_1, window_bounds = array<i64: 2, 3, 2, 128>}, {transform_indices = @transform_2, window_bounds = array<i64: 2, 1, 2, 128>}, {transform_indices = @transform_3, window_bounds = array<i64: 2, 1, 2, 128>}, {transform_indices = @transform_4, window_bounds = array<i64: 2, 1, 2, 128>}, {transform_indices = @transform_5, window_bounds = array<i64: 1, 5>}]} {
    %cst = arith.constant 0.000000e+00 : f32
    %0 = vector.broadcast %cst : f32 to vector<2x2x128xf32>
    %c0 = arith.constant 0 : index
    %c0_0 = arith.constant 0 : index
    %c0_1 = arith.constant 0 : index
    %c0_2 = arith.constant 0 : index
    %1 = vector.load %arg1[%c0, %c0_0, %c0_1, %c0_2] : memref<2x3x2x128xf32, #tpu.memory_space<vmem>>, vector<2x1x2x128xf32>
    %2 = vector.shape_cast %1 : vector<2x1x2x128xf32> to vector<2x2x128xf32>
    %c0_3 = arith.constant 0 : index
    %c0_4 = arith.constant 0 : index
    %c0_5 = arith.constant 0 : index
    %c0_6 = arith.constant 0 : index
    %3 = vector.load %arg2[%c0_3, %c0_4, %c0_5, %c0_6] : memref<2x3x2x128xf32, #tpu.memory_space<vmem>>, vector<2x1x2x128xf32>
    %4 = vector.shape_cast %3 : vector<2x1x2x128xf32> to vector<2x2x128xf32>
    %5 = arith.subf %2, %4 : vector<2x2x128xf32>
    %6 = math.absf %5 : vector<2x2x128xf32>
    %7 = arith.addf %0, %6 : vector<2x2x128xf32>
    %c0_7 = arith.constant 0 : index
    %c1 = arith.constant 1 : index
    %c0_8 = arith.constant 0 : index
    %c0_9 = arith.constant 0 : index
    %8 = vector.load %arg1[%c0_7, %c1, %c0_8, %c0_9] : memref<2x3x2x128xf32, #tpu.memory_space<vmem>>, vector<2x1x2x128xf32>
    %9 = vector.shape_cast %8 : vector<2x1x2x128xf32> to vector<2x2x128xf32>
    %c0_10 = arith.constant 0 : index
    %c1_11 = arith.constant 1 : index
    %c0_12 = arith.constant 0 : index
    %c0_13 = arith.constant 0 : index
    %10 = vector.load %arg2[%c0_10, %c1_11, %c0_12, %c0_13] : memref<2x3x2x128xf32, #tpu.memory_space<vmem>>, vector<2x1x2x128xf32>
    %11 = vector.shape_cast %10 : vector<2x1x2x128xf32> to vector<2x2x128xf32>
    %12 = arith.subf %9, %11 : vector<2x2x128xf32>
    %13 = math.absf %12 : vector<2x2x128xf32>
    %14 = arith.addf %7, %13 : vector<2x2x128xf32>
    %c0_14 = arith.constant 0 : index
    %c2 = arith.constant 2 : index
    %c0_15 = arith.constant 0 : index
    %c0_16 = arith.constant 0 : index
    %15 = vector.load %arg1[%c0_14, %c2, %c0_15, %c0_16] : memref<2x3x2x128xf32, #tpu.memory_space<vmem>>, vector<2x1x2x128xf32>
    %16 = vector.shape_cast %15 : vector<2x1x2x128xf32> to vector<2x2x128xf32>
    %c0_17 = arith.constant 0 : index
    %c2_18 = arith.constant 2 : index
    %c0_19 = arith.constant 0 : index
    %c0_20 = arith.constant 0 : index
    %17 = vector.load %arg2[%c0_17, %c2_18, %c0_19, %c0_20] : memref<2x3x2x128xf32, #tpu.memory_space<vmem>>, vector<2x1x2x128xf32>
    %18 = vector.shape_cast %17 : vector<2x1x2x128xf32> to vector<2x2x128xf32>
    %19 = arith.subf %16, %18 : vector<2x2x128xf32>
    %20 = math.absf %19 : vector<2x2x128xf32>
    %21 = arith.addf %14, %20 : vector<2x2x128xf32>
    %c0_21 = arith.constant 0 : index
    %c0_22 = arith.constant 0 : index
    %c0_23 = arith.constant 0 : index
    %c0_24 = arith.constant 0 : index
    %22 = vector.load %arg3[%c0_21, %c0_22, %c0_23, %c0_24] : memref<2x1x2x128xf32, #tpu.memory_space<vmem>>, vector<2x1x2x128xf32>
    %23 = vector.shape_cast %22 : vector<2x1x2x128xf32> to vector<2x2x128xf32>
    %c0_25 = arith.constant 0 : index
    %c0_26 = arith.constant 0 : index
    %c0_27 = arith.constant 0 : index
    %c0_28 = arith.constant 0 : index
    %24 = vector.load %arg4[%c0_25, %c0_26, %c0_27, %c0_28] : memref<2x1x2x128xf32, #tpu.memory_space<vmem>>, vector<2x1x2x128xf32>
    %25 = vector.shape_cast %24 : vector<2x1x2x128xf32> to vector<2x2x128xf32>
    %c0_29 = arith.constant 0 : index
    %c0_30 = arith.constant 0 : index
    %c0_31 = arith.constant 0 : index
    %c0_32 = arith.constant 0 : index
    %26 = vector.load %arg5[%c0_29, %c0_30, %c0_31, %c0_32] : memref<2x1x2x128xf32, #tpu.memory_space<vmem>>, vector<2x1x2x128xf32>
    %27 = vector.shape_cast %26 : vector<2x1x2x128xf32> to vector<2x2x128xf32>
    %28 = arith.mulf %21, %23 : vector<2x2x128xf32>
    %29 = vector.shape_cast %28 : vector<2x2x128xf32> to vector<1x2x2x128xf32>
    %cst_33 = arith.constant dense<0.000000e+00> : vector<1xf32>
    %30 = vector.multi_reduction <add>, %29, %cst_33 [1, 2, 3] : vector<1x2x2x128xf32> to vector<1xf32>
    %31 = vector.shape_cast %30 : vector<1xf32> to vector<1x1x1x1xf32>
    %32 = vector.extract %31[0, 0, 0, 0] : f32 from vector<1x1x1x1xf32>
    %c0_34 = arith.constant 0 : index
    %c0_35 = arith.constant 0 : index
    %33 = memref.load %arg6[%c0_34, %c0_35] : memref<1x5xf32, #tpu.memory_space<smem>>
    memref.store %32, %arg6[%c0_34, %c0_35] : memref<1x5xf32, #tpu.memory_space<smem>>
    %34 = vector.shape_cast %21 : vector<2x2x128xf32> to vector<1x2x2x128xf32>
    %cst_36 = arith.constant dense<0.000000e+00> : vector<1xf32>
    %35 = vector.multi_reduction <add>, %34, %cst_36 [1, 2, 3] : vector<1x2x2x128xf32> to vector<1xf32>
    %36 = vector.shape_cast %35 : vector<1xf32> to vector<1x1x1x1xf32>
    %37 = vector.extract %36[0, 0, 0, 0] : f32 from vector<1x1x1x1xf32>
    %c0_37 = arith.constant 0 : index
    %c1_38 = arith.constant 1 : index
    %38 = memref.load %arg6[%c0_37, %c1_38] : memref<1x5xf32, #tpu.memory_space<smem>>
    memref.store %37, %arg6[%c0_37, %c1_38] : memref<1x5xf32, #tpu.memory_space<smem>>
    %39 = vector.shape_cast %23 : vector<2x2x128xf32> to vector<1x2x2x128xf32>
    %cst_39 = arith.constant dense<0.000000e+00> : vector<1xf32>
    %40 = vector.multi_reduction <add>, %39, %cst_39 [1, 2, 3] : vector<1x2x2x128xf32> to vector<1xf32>
    %41 = vector.shape_cast %40 : vector<1xf32> to vector<1x1x1x1xf32>
    %42 = vector.extract %41[0, 0, 0, 0] : f32 from vector<1x1x1x1xf32>
    %c0_40 = arith.constant 0 : index
    %c2_41 = arith.constant 2 : index
    %43 = memref.load %arg6[%c0_40, %c2_41] : memref<1x5xf32, #tpu.memory_space<smem>>
    memref.store %42, %arg6[%c0_40, %c2_41] : memref<1x5xf32, #tpu.memory_space<smem>>
    %44 = vector.shape_cast %25 : vector<2x2x128xf32> to vector<1x2x2x128xf32>
    %cst_42 = arith.constant dense<0.000000e+00> : vector<1xf32>
    %45 = vector.multi_reduction <add>, %44, %cst_42 [1, 2, 3] : vector<1x2x2x128xf32> to vector<1xf32>
    %46 = vector.shape_cast %45 : vector<1xf32> to vector<1x1x1x1xf32>
    %47 = vector.extract %46[0, 0, 0, 0] : f32 from vector<1x1x1x1xf32>
    %c0_43 = arith.constant 0 : index
    %c3 = arith.constant 3 : index
    %48 = memref.load %arg6[%c0_43, %c3] : memref<1x5xf32, #tpu.memory_space<smem>>
    memref.store %47, %arg6[%c0_43, %c3] : memref<1x5xf32, #tpu.memory_space<smem>>
    %49 = vector.shape_cast %27 : vector<2x2x128xf32> to vector<1x2x2x128xf32>
    %cst_44 = arith.constant dense<0.000000e+00> : vector<1xf32>
    %50 = vector.multi_reduction <add>, %49, %cst_44 [1, 2, 3] : vector<1x2x2x128xf32> to vector<1xf32>
    %51 = vector.shape_cast %50 : vector<1xf32> to vector<1x1x1x1xf32>
    %52 = vector.extract %51[0, 0, 0, 0] : f32 from vector<1x1x1x1xf32>
    %c0_45 = arith.constant 0 : index
    %c4 = arith.constant 4 : index
    %53 = memref.load %arg6[%c0_45, %c4] : memref<1x5xf32, #tpu.memory_space<smem>>
    memref.store %52, %arg6[%c0_45, %c4] : memref<1x5xf32, #tpu.memory_space<smem>>
    return
  }
  func.func @transform_0(%arg0: i32) -> (i32, i32, i32, i32) {
    %c0_i32 = arith.constant 0 : i32
    %c0_i32_0 = arith.constant 0 : i32
    %c0_i32_1 = arith.constant 0 : i32
    %c0_i32_2 = arith.constant 0 : i32
    return %c0_i32, %c0_i32_0, %arg0, %c0_i32_1 : i32, i32, i32, i32
  }
  func.func @transform_1(%arg0: i32) -> (i32, i32, i32, i32) {
    %c0_i32 = arith.constant 0 : i32
    %c0_i32_0 = arith.constant 0 : i32
    %c0_i32_1 = arith.constant 0 : i32
    %c0_i32_2 = arith.constant 0 : i32
    return %c0_i32, %c0_i32_0, %arg0, %c0_i32_1 : i32, i32, i32, i32
  }
  func.func @transform_2(%arg0: i32) -> (i32, i32, i32, i32) {
    %c0_i32 = arith.constant 0 : i32
    %c0_i32_0 = arith.constant 0 : i32
    %c0_i32_1 = arith.constant 0 : i32
    %c0_i32_2 = arith.constant 0 : i32
    return %c0_i32, %c0_i32_0, %arg0, %c0_i32_1 : i32, i32, i32, i32
  }
  func.func @transform_3(%arg0: i32) -> (i32, i32, i32, i32) {
    %c0_i32 = arith.constant 0 : i32
    %c0_i32_0 = arith.constant 0 : i32
    %c0_i32_1 = arith.constant 0 : i32
    %c0_i32_2 = arith.constant 0 : i32
    return %c0_i32, %c0_i32_0, %arg0, %c0_i32_1 : i32, i32, i32, i32
  }
  func.func @transform_4(%arg0: i32) -> (i32, i32, i32, i32) {
    %c0_i32 = arith.constant 0 : i32
    %c0_i32_0 = arith.constant 0 : i32
    %c0_i32_1 = arith.constant 0 : i32
    %c0_i32_2 = arith.constant 0 : i32
    return %c0_i32, %c0_i32_0, %arg0, %c0_i32_1 : i32, i32, i32, i32
  }
  func.func @transform_5(%arg0: i32) -> (i32, i32) {
    %c0_i32 = arith.constant 0 : i32
    %c0_i32_0 = arith.constant 0 : i32
    return %arg0, %c0_i32 : i32, i32
  }
}

</mosaic_0001>

<llo_original>
// kernel: inpaint_loss.1
$region0: #{inpaint_loss.1}
  #allocation0 [shape = 'u32[]', space=smem, size = 0x4, offset = 0x4, fixed_abs, tag = 'smem constant byte address 0x4 - core index']
  #allocation1 [shape = 'u32[144,128]{1,0:T(1,128)}', space=vmem, size = 0x12000, scoped, tag = 'internal scratch']
  %s0 = inlined_call_operand.vmem [shape: f32[2,3,2,128], index: 0, kind: input, shape index: {}]
  %s1 = inlined_call_operand.vmem [shape: f32[2,3,2,128], index: 1, kind: input, shape index: {}]
  %s2 = inlined_call_operand.vmem [shape: f32[2,1,2,128], index: 2, kind: input, shape index: {}]
  %s3 = inlined_call_operand.vmem [shape: f32[2,1,2,128], index: 3, kind: input, shape index: {}]
  %s4 = inlined_call_operand.vmem [shape: f32[2,1,2,128], index: 4, kind: input, shape index: {}]
  %s5 = inlined_call_operand.vmem [shape: f32[1,5], index: 5, kind: output, shape index: {}]
  %s6 = sld [smem:[#allocation0]]
  $region30: #{inpaint_loss.1} parent=0
    _
  %s8 = ssub.s32 1, %s6
  %s9 = scalar_select 0, %s8, %s6
  $region1: #{inpaint_loss.1} parent=0
    #allocation2 [shape = 'u8[512]{0}', space=smem, size = 0x200, scoped, tag = 'output window, operand 0, single buffered']
    #allocation3 [shape = 's32[1]{0}', space=sflag, size = 0x4, scoped, tag = 'scoped memory for inpaint_loss.1']
    %10 = vsyncpa [#allocation3], 0
    // Predicated region
    $region2: #{inpaint_loss.1} parent=1 // pred_check
      _
    $region3: #{inpaint_loss.1} parent=1 // pred_check_branch
      %12 = sbr.rel (0) target = $region5
    $region4: #{inpaint_loss.1} parent=1 // pred_region
      _
    $region5: #{inpaint_loss.1} parent=1 // pred_fallthru
      _
    // Predicated region
    $region6: #{inpaint_loss.1} parent=1 // pred_check
      _
    $region7: #{inpaint_loss.1} parent=1 // pred_check_branch
      %14 = sbr.rel (0) target = $region9
    $region8: #{inpaint_loss.1} parent=1 // pred_region
      _
    $region9: #{inpaint_loss.1} parent=1 // pred_fallthru
      _
    // Predicated region
    $region10: #{inpaint_loss.1} parent=1 // pred_check
      _
    $region11: #{inpaint_loss.1} parent=1 // pred_check_branch
      %16 = sbr.rel (0) target = $region13
    $region12: #{inpaint_loss.1} parent=1 // pred_region
      _
    $region13: #{inpaint_loss.1} parent=1 // pred_fallthru
      _
    // Predicated region
    $region14: #{inpaint_loss.1} parent=1 // pred_check
      _
    $region15: #{inpaint_loss.1} parent=1 // pred_check_branch
      %18 = sbr.rel (0) target = $region17
    $region16: #{inpaint_loss.1} parent=1 // pred_region
      _
    $region17: #{inpaint_loss.1} parent=1 // pred_fallthru
      _
    // Predicated region
    $region18: #{inpaint_loss.1} parent=1 // pred_check
      _
    $region19: #{inpaint_loss.1} parent=1 // pred_check_branch
      %20 = sbr.rel (0) target = $region21
    $region20: #{inpaint_loss.1} parent=1 // pred_region
      _
    $region21: #{inpaint_loss.1} parent=1 // pred_fallthru
      _
    %v21 = vld [vmem:[%s0] sm:$0x3]
    %v22 = vld [vmem:[%s0 + $0x6] sm:$0x3]
    %v23 = vld [vmem:[%s1] sm:$0x3]
    %v24 = vld [vmem:[%s1 + $0x6] sm:$0x3]
    %v25 = vsub.f32 %v21, %v23
    %v26 = vsub.f32 %v22, %v24
    %v27 = vand.u32 2147483647, %v25
    %v28 = vand.u32 2147483647, %v26
    %v29 = vadd.f32 %v27, 0.0
    %v30 = vadd.f32 %v28, 0.0
    %s31 = scalar_lea.vmem %s0, 2
    %v32 = vld [vmem:[%s31] sm:$0x3]
    %v33 = vld [vmem:[%s31 + $0x6] sm:$0x3]
    %s34 = scalar_lea.vmem %s1, 2
    %v35 = vld [vmem:[%s34] sm:$0x3]
    %v36 = vld [vmem:[%s34 + $0x6] sm:$0x3]
    %v37 = vsub.f32 %v32, %v35
    %v38 = vsub.f32 %v33, %v36
    %v39 = vand.u32 2147483647, %v37
    %v40 = vand.u32 2147483647, %v38
    %v41 = vadd.f32 %v29, %v39
    %v42 = vadd.f32 %v30, %v40
    %s43 = scalar_lea.vmem %s0, 4
    %v44 = vld [vmem:[%s43] sm:$0x3]
    %v45 = vld [vmem:[%s43 + $0x6] sm:$0x3]
    %s46 = scalar_lea.vmem %s1, 4
    %v47 = vld [vmem:[%s46] sm:$0x3]
    %v48 = vld [vmem:[%s46 + $0x6] sm:$0x3]
    %v49 = vsub.f32 %v44, %v47
    %v50 = vsub.f32 %v45, %v48
    %v51 = vand.u32 2147483647, %v49
    %v52 = vand.u32 2147483647, %v50
    %v53 = vadd.f32 %v41, %v51
    %v54 = vadd.f32 %v42, %v52
    %v55 = vld [vmem:[%s2] sm:$0x3]
    %v56 = vld [vmem:[%s2 + $0x2] sm:$0x3]
    %v57 = vld [vmem:[%s3] sm:$0x3]
    %v58 = vld [vmem:[%s3 + $0x2] sm:$0x3]
    %v59 = vld [vmem:[%s4] sm:$0x3]
    %v60 = vld [vmem:[%s4 + $0x2] sm:$0x3]
    %v61 = vmul.f32 %v53, %v55
    %v62 = vmul.f32 %v54, %v56
    %vm63 = vcmask 1041408
    %v64 = vsel %vm63, %v61, 0.0
    %v65 = vsel %vm63, %v62, 0.0
    %v66 = vadd.f32 %v64, %v65
    %67 = vadd.xlane.f32.xlu0 %v66
    %v68 = vpop.xlane.xlu0 %67
    %v69 = vrot.slane %v68, 4
    %v70 = vadd.f32 %v68, %v69
    %v71 = vrot.slane %v70, 2
    %v72 = vadd.f32 %v70, %v71
    %v73 = vrot.slane %v72, 1
    %v74 = vadd.f32 %v72, %v73
    %s75 = vtos %v74
    %s76 = scalar_lea.smem [#allocation2], 0
    %77 = sst [smem:[%s76]] %s75
    %v78 = vsel %vm63, %v53, 0.0
    %v79 = vsel %vm63, %v54, 0.0
    %v80 = vadd.f32 %v78, %v79
    %81 = vadd.xlane.f32.xlu0 %v80
    %v82 = vpop.xlane.xlu0 %81
    %v83 = vrot.slane %v82, 4
    %v84 = vadd.f32 %v82, %v83
    %v85 = vrot.slane %v84, 2
    %v86 = vadd.f32 %v84, %v85
    %v87 = vrot.slane %v86, 1
    %v88 = vadd.f32 %v86, %v87
    %s89 = vtos %v88
    %s90 = scalar_lea.smem [#allocation2], 1
    %91 = sst [smem:[%s90]] %s89
    %v92 = vsel %vm63, %v55, 0.0
    %v93 = vsel %vm63, %v56, 0.0
    %v94 = vadd.f32 %v92, %v93
    %95 = vadd.xlane.f32.xlu0 %v94
    %v96 = vpop.xlane.xlu0 %95
    %v97 = vrot.slane %v96, 4
    %v98 = vadd.f32 %v96, %v97
    %v99 = vrot.slane %v98, 2
    %v100 = vadd.f32 %v98, %v99
    %v101 = vrot.slane %v100, 1
    %v102 = vadd.f32 %v100, %v101
    %s103 = vtos %v102
    %s104 = scalar_lea.smem [#allocation2], 2
    %105 = sst [smem:[%s104]] %s103
    %v106 = vsel %vm63, %v57, 0.0
    %v107 = vsel %vm63, %v58, 0.0
    %v108 = vadd.f32 %v106, %v107
    %109 = vadd.xlane.f32.xlu0 %v108
    %v110 = vpop.xlane.xlu0 %109
    %v111 = vrot.slane %v110, 4
    %v112 = vadd.f32 %v110, %v111
    %v113 = vrot.slane %v112, 2
    %v114 = vadd.f32 %v112, %v113
    %v115 = vrot.slane %v114, 1
    %v116 = vadd.f32 %v114, %v115
    %s117 = vtos %v116
    %s118 = scalar_lea.smem [#allocation2], 3
    %119 = sst [smem:[%s118]] %s117
    %v120 = vsel %vm63, %v59, 0.0
    %v121 = vsel %vm63, %v60, 0.0
    %v122 = vadd.f32 %v120, %v121
    %123 = vadd.xlane.f32.xlu0 %v122
    %v124 = vpop.xlane.xlu0 %123
    %v125 = vrot.slane %v124, 4
    %v126 = vadd.f32 %v124, %v125
    %v127 = vrot.slane %v126, 2
    %v128 = vadd.f32 %v126, %v127
    %v129 = vrot.slane %v128, 1
    %v130 = vadd.f32 %v128, %v129
    %s131 = vtos %v130
    %s132 = scalar_lea.smem [#allocation2], 4
    %133 = sst [smem:[%s132]] %s131
    // Predicated region
    $region22: #{inpaint_loss.1} parent=1 // pred_check
      _
    $region23: #{inpaint_loss.1} parent=1 // pred_check_branch
      %135 = sbr.rel (0) target = $region25
    $region24: #{inpaint_loss.1} parent=1 // pred_region
      %s137 = ssub.s32 16, 16
      %138 = vsyncadd [#allocation3], %s137
      %s140 = sshll.u32 %s5, 4
      %s141 = int_to_ptr.vmem [resolvable:$true] %s140
      %143 = dma.smem_to_vmem [#allocation2], 16, %s141, [#allocation3]
    $region25: #{inpaint_loss.1} parent=1 // pred_fallthru
      _
    // Predicated region
    $region26: #{inpaint_loss.1} parent=1 // pred_check
      _
    $region27: #{inpaint_loss.1} parent=1 // pred_check_branch
      %145 = sbr.rel (0) target = $region29
    $region28: #{inpaint_loss.1} parent=1 // pred_region
      %146 = dma.done [#allocation3], 16
    $region29: #{inpaint_loss.1} parent=1 // pred_fallthru
      _
    %147 = sfence
    %148 = vsyncpa [#allocation3], 1

</llo_original>
